<compile_context>
chip_gen: v7x
topology: tpu7x:2x2x1
jax: 0.10.0
libtpu: 0.0.40
codegen_flags: <defaults>
</compile_context>

<pallas_src>
import jax
import jax.numpy as jnp
from jax.experimental import pallas as pl
from jax.experimental.pallas import tpu as pltpu


# ----------------------------- kernel bodies ------------------------------ #

def _scores(x_ref, w_ref, b_ref):
    """Linear(H -> 1) scores: input-dtype multiply, f32 lane-reduce over H."""
    x = x_ref[...]                                    # (tb, S, H) native dtype
    w = w_ref[...]                                    # (1, H)     native dtype
    prod = x * w[:, None, :]                          # bf16 VALU on v6e/v7x
    return jnp.sum(prod.astype(jnp.float32), axis=-1) + b_ref[0]   # (tb, S) f32


def _softmax_context(x_ref, scores, ctx_ref, wts_ref):
    """Softmax over S + batched MXU weighted sum of x over S (f32 accum)."""
    m = jnp.max(scores, axis=-1, keepdims=True)                 # (tb, 1)
    e = jnp.exp(scores - m)                                     # (tb, S)
    denom = jnp.sum(e, axis=-1, keepdims=True)                  # (tb, 1)
    # EUP approx reciprocal + one Newton step: f32 accuracy, divide off the VPU.
    r = pl.reciprocal(denom, approx=True)
    r = r * (2.0 - denom * r)
    weights = e * r                                             # (tb, S) f32

    # Re-read the VMEM-resident x block; do NOT keep an f32 upcast live across
    # both phases.
    x = x_ref[...]                                              # (tb, S, H)
    w3 = weights[:, None, :].astype(x.dtype)                    # (tb, 1, S)
    # Batched (M=1) contraction over S on the MXU; x stays in its native
    # dtype, accumulation in f32. HIGHEST keeps f32 inputs f32-accurate.
    ctx = jnp.einsum(
        "bqs,bsh->bqh", w3, x,
        preferred_element_type=jnp.float32,
        precision=jax.lax.Precision.HIGHEST,
    )[:, 0, :]                                                  # (tb, H) f32

    ctx_ref[...] = ctx.astype(ctx_ref.dtype)
    wts_ref[...] = weights.astype(wts_ref.dtype)


def _attn_kernel_nomask(x_ref, w_ref, b_ref, ctx_ref, wts_ref):
    scores = _scores(x_ref, w_ref, b_ref)
    _softmax_context(x_ref, scores, ctx_ref, wts_ref)


def _attn_kernel_masked(x_ref, w_ref, b_ref, mbias_ref, ctx_ref, wts_ref):
    # masked_fill(mask == 0, -inf) == add a precomputed {0, -inf} bias.
    scores = _scores(x_ref, w_ref, b_ref) + mbias_ref[...]
    _softmax_context(x_ref, scores, ctx_ref, wts_ref)


# ------------------------------- tiling ------------------------------------ #

def _vmem_capacity_bytes():
    try:
        return int(pltpu.get_tpu_info().vmem_capacity_bytes)
    except Exception:
        return 64 * 1024 * 1024     # v7x per-TC size; conservative fallback


def _pick_tile_and_vmem_limit(B, S, H, x_itemsize):
    """Batch tile + explicit scoped-VMEM limit, derived per generation."""
    cap = _vmem_capacity_bytes()                     # 128 MiB v5e/v6e, 64 MiB v7x
    target = min(cap // 2, 64 * 1024 * 1024)         # headroom for compiler scratch

    # Pessimistic per-batch-row working set:
    #   x row: double-buffered in its native dtype + one f32-sized transient
    #          (the promote feeding the score reduction / MXU feed),
    #   (S,)-rows: mask bias + scores/exp/weights f32 temps + wts output (x2),
    #   (H,)-rows: context output (x2).
    per_row = (S * H * (2 * x_itemsize + 4)
               + 6 * S * 4
               + 2 * H * 4)
    fixed = 4 * H * 4 + (64 << 10)                   # weight block, bias, slack

    tb = max(1, (target * 3 // 4 - fixed) // per_row)

    # v7x megacore: keep >= 2 grid steps whenever B is large enough to split
    # on 8-row alignment (the "parallel" batch axis feeds the two TCs).
    half_aligned = ((pl.cdiv(B, 2) + 7) // 8) * 8
    tb = min(tb, max(8, half_aligned))

    if tb >= 8:
        tb = (tb // 8) * 8                           # sublane-aligned blocks
    elif B > tb:
        # (8,128) rule on the (tb, S)/(tb, H) blocks needs tb % 8 == 0 unless
        # tb == B; fall back to 8 rows and size the VMEM limit to match.
        # TODO(synk): S-tiled online-softmax grid axis for huge S*H.
        tb = 8
    tb = max(1, min(B, tb))

    need = tb * per_row + fixed
    vmem_limit = int(min(cap - (8 << 20), max(need + (4 << 20), 32 << 20)))
    return tb, vmem_limit


# ------------------------------- wrapper ----------------------------------- #

def simple_attention(lstm_out, weight, bias, mask=None):
    """Pallas forward of SimpleAttention.

    lstm_out: [B, S, H] (streamed in its native dtype; f32 accumulation)
    weight:   [1, H]    (nn.Linear(hidden_size, 1).weight)
    bias:     [1]       (nn.Linear(hidden_size, 1).bias)
    mask:     [B, S] or None (nonzero = keep)
    Returns (context_vector [B, H], attention_weights [B, S]) in lstm_out.dtype.
    """
    B, S, H = lstm_out.shape
    out_dtype = lstm_out.dtype
    w = weight.reshape(1, H).astype(lstm_out.dtype)   # single cast in the wrapper
    b = bias.reshape(1).astype(jnp.float32)

    tb, vmem_limit = _pick_tile_and_vmem_limit(
        B, S, H, jnp.dtype(lstm_out.dtype).itemsize)
    grid = (pl.cdiv(B, tb),)

    x_spec = pl.BlockSpec((tb, S, H), lambda i: (i, 0, 0))
    w_spec = pl.BlockSpec((1, H), lambda i: (0, 0))               # constant block
    b_spec = pl.BlockSpec(memory_space=pltpu.MemorySpace.SMEM)    # scalar in SMEM
    out_specs = (
        pl.BlockSpec((tb, H), lambda i: (i, 0)),
        pl.BlockSpec((tb, S), lambda i: (i, 0)),
    )
    out_shape = (
        jax.ShapeDtypeStruct((B, H), out_dtype),
        jax.ShapeDtypeStruct((B, S), out_dtype),
    )
    params = pltpu.CompilerParams(
        dimension_semantics=("parallel",),
        vmem_limit_bytes=vmem_limit,
    )

    if mask is None:
        # Specialized kernel: no mask DMA, no add.
        return pl.pallas_call(
            _attn_kernel_nomask,
            out_shape=out_shape,
            grid=grid,
            in_specs=[x_spec, w_spec, b_spec],
            out_specs=out_specs,
            compiler_params=params,
        )(lstm_out, w, b)

    # Additive {0, -inf} bias precomputed once in the wrapper: one VPU add in
    # the kernel, no int8 tiling fight / compare / select.
    mask_bias = jnp.where(mask == 0, -jnp.inf, 0.0).astype(jnp.float32)
    mask_spec = pl.BlockSpec((tb, S), lambda i: (i, 0))
    return pl.pallas_call(
        _attn_kernel_masked,
        out_shape=out_shape,
        grid=grid,
        in_specs=[x_spec, w_spec, b_spec, mask_spec],
        out_specs=out_specs,
        compiler_params=params,
    )(lstm_out, w, b, mask_bias)


# ------------------------------ reference ---------------------------------- #

def _reference(lstm_out, weight, bias, mask=None):
    scores = jnp.einsum("bsh,oh->bso", lstm_out, weight)[..., 0] + bias[0]
    if mask is not None:
        scores = jnp.where(mask == 0, -jnp.inf, scores)
    w = jax.nn.softmax(scores, axis=1)
    ctx = jnp.einsum("bs,bsh->bh", w, lstm_out)
    return ctx, w


if __name__ == "__main__":
    B, S, H = 2, 8, 32  # batch, seq, hidden

    key = jax.random.PRNGKey(0)
    k_x, k_w, k_b, _ = jax.random.split(key, 4)

    lstm_out = jax.random.normal(k_x, (B, S, H), dtype=jnp.float32)
    # nn.Linear(hidden_size, 1): weight [1, H], bias [1].
    weight = jax.random.uniform(k_w, (1, H), dtype=jnp.float32,
                                minval=-1.0 / jnp.sqrt(H), maxval=1.0 / jnp.sqrt(H))
    bias = jax.random.uniform(k_b, (1,), dtype=jnp.float32,
                              minval=-1.0 / jnp.sqrt(H), maxval=1.0 / jnp.sqrt(H))
    # Example mask: last two timesteps of batch element 1 are padding.
    mask = jnp.ones((B, S), dtype=jnp.float32).at[1, -2:].set(0.0)

    # Attention weights: f32 softmax with EUP-seeded + Newton-refined recip.
    W_TOL = 1e-4
    # Context: goes through the MXU; tolerance leaves margin in case the
    # backend demotes the f32 contraction despite precision=HIGHEST.
    C_TOL = 2e-3

    # No-mask path.
    ctx, wts = simple_attention(lstm_out, weight, bias, mask=None)
    jax.block_until_ready((ctx, wts))
    ctx_ref, wts_ref = _reference(lstm_out, weight, bias, mask=None)
    assert jnp.allclose(wts, wts_ref, atol=W_TOL, rtol=W_TOL)
    assert jnp.allclose(ctx, ctx_ref, atol=C_TOL, rtol=C_TOL)

    # Masked path.
    ctx_m, wts_m = simple_attention(lstm_out, weight, bias, mask=mask)
    jax.block_until_ready((ctx_m, wts_m))
    ctx_mr, wts_mr = _reference(lstm_out, weight, bias, mask=mask)
    assert jnp.allclose(wts_m, wts_mr, atol=W_TOL, rtol=W_TOL)
    assert jnp.allclose(ctx_m, ctx_mr, atol=C_TOL, rtol=C_TOL)
    assert jnp.all(wts_m[1, -2:] == 0.0)

    print("KERNEL_OK")
</pallas_src>

<mosaic_0001>
module attributes {stable_mosaic.version = 11 : i64} {
  func.func @_attn_kernel_nomask(%arg0: i32, %arg1: memref<2x8x32xf32, #tpu.memory_space<vmem>>, %arg2: memref<1x32xf32, #tpu.memory_space<vmem>>, %arg3: memref<1xf32, #tpu.memory_space<smem>>, %arg4: memref<2x32xf32, #tpu.memory_space<vmem>>, %arg5: memref<2x8xf32, #tpu.memory_space<vmem>>) attributes {dimension_semantics = [#tpu.dimension_semantics<parallel>], iteration_bounds = array<i64: 1>, scalar_prefetch = 0 : i64, scratch_operands = 0 : i64, tpu.core_type = #tpu.core_type<tc>, window_params = [{transform_indices = @transform_0, window_bounds = array<i64: 2, 8, 32>}, {pipeline_mode = #tpu.pipeline_mode<synchronous>, transform_indices = @transform_1, window_bounds = array<i64: 1, 32>}, {transform_indices = @transform_2, window_bounds = array<i64: 1>}, {transform_indices = @transform_3, window_bounds = array<i64: 2, 32>}, {transform_indices = @transform_4, window_bounds = array<i64: 2, 8>}]} {
    %c0 = arith.constant 0 : index
    %c0_0 = arith.constant 0 : index
    %c0_1 = arith.constant 0 : index
    %0 = vector.load %arg1[%c0, %c0_0, %c0_1] : memref<2x8x32xf32, #tpu.memory_space<vmem>>, vector<2x8x32xf32>
    %c0_2 = arith.constant 0 : index
    %c0_3 = arith.constant 0 : index
    %1 = vector.load %arg2[%c0_2, %c0_3] : memref<1x32xf32, #tpu.memory_space<vmem>>, vector<1x32xf32>
    %2 = vector.shape_cast %1 : vector<1x32xf32> to vector<1x1x32xf32>
    %3 = vector.broadcast %2 : vector<1x1x32xf32> to vector<2x8x32xf32>
    %4 = arith.mulf %0, %3 : vector<2x8x32xf32>
    %cst = arith.constant dense<0.000000e+00> : vector<2x8xf32>
    %5 = vector.multi_reduction <add>, %4, %cst [2] : vector<2x8x32xf32> to vector<2x8xf32>
    %c0_4 = arith.constant 0 : index
    %6 = memref.load %arg3[%c0_4] : memref<1xf32, #tpu.memory_space<smem>>
    %7 = vector.broadcast %6 : f32 to vector<2x8xf32>
    %8 = arith.addf %5, %7 : vector<2x8xf32>
    %cst_5 = arith.constant dense<0xFF800000> : vector<2xf32>
    %9 = vector.multi_reduction <maximumf>, %8, %cst_5 [1] : vector<2x8xf32> to vector<2xf32>
    %10 = vector.shape_cast %9 : vector<2xf32> to vector<2x1xf32>
    %11 = vector.broadcast %10 : vector<2x1xf32> to vector<2x8xf32>
    %12 = arith.subf %8, %11 : vector<2x8xf32>
    %13 = math.exp %12 : vector<2x8xf32>
    %cst_6 = arith.constant dense<0.000000e+00> : vector<2xf32>
    %14 = vector.multi_reduction <add>, %13, %cst_6 [1] : vector<2x8xf32> to vector<2xf32>
    %15 = vector.shape_cast %14 : vector<2xf32> to vector<2x1xf32>
    %16 = tpu.reciprocal %15 {approx = true} : vector<2x1xf32> -> vector<2x1xf32>
    %17 = arith.mulf %15, %16 : vector<2x1xf32>
    %cst_7 = arith.constant 2.000000e+00 : f32
    %18 = vector.broadcast %cst_7 : f32 to vector<2x1xf32>
    %19 = arith.subf %18, %17 : vector<2x1xf32>
    %20 = arith.mulf %16, %19 : vector<2x1xf32>
    %21 = vector.broadcast %20 : vector<2x1xf32> to vector<2x8xf32>
    %22 = arith.mulf %13, %21 : vector<2x8xf32>
    %c0_8 = arith.constant 0 : index
    %c0_9 = arith.constant 0 : index
    %c0_10 = arith.constant 0 : index
    %23 = vector.load %arg1[%c0_8, %c0_9, %c0_10] : memref<2x8x32xf32, #tpu.memory_space<vmem>>, vector<2x8x32xf32>
    %24 = vector.shape_cast %22 : vector<2x8xf32> to vector<2x1x8xf32>
    "tpu.trace_start"() <{level = 10 : i32, message = "bqs,bsh->bqh"}> : () -> ()
    %cst_11 = arith.constant dense<0.000000e+00> : vector<2x1x32xf32>
    %25 = tpu.matmul %24, %23, %cst_11 {dimension_numbers = #tpu.dot_dimension_numbers<[2], [1], [1], [2], [0, 0, 0, 1, 1, 2], [0], [0]>, precision = #tpu.contract_precision<fp32>} : vector<2x1x8xf32>, vector<2x8x32xf32>, vector<2x1x32xf32> -> vector<2x1x32xf32>
    "tpu.trace_stop"() : () -> ()
    %26 = vector.shape_cast %25 : vector<2x1x32xf32> to vector<2x32xf32>
    %c0_12 = arith.constant 0 : index
    %c0_13 = arith.constant 0 : index
    %27 = vector.load %arg4[%c0_12, %c0_13] : memref<2x32xf32, #tpu.memory_space<vmem>>, vector<2x32xf32>
    tpu.vector_store %arg4[%c0_12, %c0_13], %26 {strides = array<i32>} : memref<2x32xf32, #tpu.memory_space<vmem>>, vector<2x32xf32>,
    %c0_14 = arith.constant 0 : index
    %c0_15 = arith.constant 0 : index
    %28 = vector.load %arg5[%c0_14, %c0_15] : memref<2x8xf32, #tpu.memory_space<vmem>>, vector<2x8xf32>
    tpu.vector_store %arg5[%c0_14, %c0_15], %22 {strides = array<i32>} : memref<2x8xf32, #tpu.memory_space<vmem>>, vector<2x8xf32>,
    return
  }
  func.func @transform_0(%arg0: i32) -> (i32, i32, i32) {
    %c0_i32 = arith.constant 0 : i32
    %c0_i32_0 = arith.constant 0 : i32
    %c0_i32_1 = arith.constant 0 : i32
    return %arg0, %c0_i32, %c0_i32_0 : i32, i32, i32
  }
  func.func @transform_1(%arg0: i32) -> (i32, i32) {
    %c0_i32 = arith.constant 0 : i32
    %c0_i32_0 = arith.constant 0 : i32
    %c0_i32_1 = arith.constant 0 : i32
    return %c0_i32, %c0_i32_0 : i32, i32
  }
  func.func @transform_2(%arg0: i32) -> i32 {
    %c0_i32 = arith.constant 0 : i32
    %c0_i32_0 = arith.constant 0 : i32
    return %c0_i32 : i32
  }
  func.func @transform_3(%arg0: i32) -> (i32, i32) {
    %c0_i32 = arith.constant 0 : i32
    %c0_i32_0 = arith.constant 0 : i32
    return %arg0, %c0_i32 : i32, i32
  }
  func.func @transform_4(%arg0: i32) -> (i32, i32) {
    %c0_i32 = arith.constant 0 : i32
    %c0_i32_0 = arith.constant 0 : i32
    return %arg0, %c0_i32 : i32, i32
  }
}

</mosaic_0001>

<llo_original>
// kernel: tpu_custom_call.1
$region0: #{tpu_custom_call.1}
  #allocation0 [shape = 'u32[]', space=smem, size = 0x4, offset = 0x4, fixed_abs, tag = 'smem constant byte address 0x4 - core index']
  #allocation1 [shape = 'u32[144,128]{1,0:T(1,128)}', space=vmem, size = 0x12000, scoped, tag = 'internal scratch']
  #allocation2 [shape = 'f32[1]{0:T(128)S(6)}', space=smem, size = 0x200, scoped, tag = 'scoped memory for tpu_custom_call.1']
  %s0 = inlined_call_operand.hbm [shape: f32[2,8,32], index: 0, kind: input, shape index: {}]
  %s1 = inlined_call_operand.vmem [shape: f32[1,32], index: 1, kind: input, shape index: {}]
  %s2 = inlined_call_operand.<no memory space> [shape: f32[1], index: 2, kind: input, shape index: {}]
  %s3 = inlined_call_operand.hbm [shape: f32[2,32], index: 3, kind: output, shape index: {0}]
  %s4 = inlined_call_operand.hbm [shape: f32[2,8], index: 4, kind: output, shape index: {1}]
  %5 = xla_tuple %s3, %s4
  %s6 = sld [smem:[#allocation0]]
  $region34: #{tpu_custom_call.1} parent=0
    _
  %s8 = ssub.s32 1, %s6
  %s9 = scalar_select 0, %s8, %s6
  %10 = sst [smem:[#allocation2]] %s2
  $region1: #{tpu_custom_call.1} parent=0
    #allocation3 [shape = 'u8[8192]{0}', space=vmem, size = 0x2000, scoped, tag = 'input window, operand 0, single buffered']
    #allocation4 [shape = 's32[1]{0}', space=sflag, size = 0x4, scoped, tag = 'scoped memory for tpu_custom_call.1']
    #allocation5 [shape = 's32[1]{0}', space=sflag, size = 0x4, scoped, tag = 'scoped memory for tpu_custom_call.1']
    #allocation6 [shape = 'u8[1024]{0}', space=vmem, size = 0x400, scoped, tag = 'output window, operand 0, single buffered']
    #allocation7 [shape = 'u8[1024]{0}', space=vmem, size = 0x400, scoped, tag = 'output window, operand 1, single buffered']
    #allocation8 [shape = 's32[1]{0}', space=sflag, size = 0x4, scoped, tag = 'scoped memory for tpu_custom_call.1']
    %11 = vsyncpa [#allocation4], 0
    %12 = vsyncpa [#allocation5], 0
    %13 = vsyncpa [#allocation8], 0
    // Predicated region
    $region2: #{tpu_custom_call.1} parent=1 // pred_check
      _
    $region3: #{tpu_custom_call.1} parent=1 // pred_check_branch
      %15 = sbr.rel (0) target = $region5
    $region4: #{tpu_custom_call.1} parent=1 // pred_region
      %s17 = ssub.s32 256, 256
      %18 = vsyncadd [#allocation4], %s17
      %s19 = sshll.u32 [#allocation3], 4
      %s20 = int_to_ptr.vmem [resolvable:$true] %s19
      %25 = dma.hbm_to_vmem [thread:$0]  %s0, 256, %s20, [#allocation4], 128, 128, 8
    $region5: #{tpu_custom_call.1} parent=1 // pred_fallthru
      _
    // Predicated region
    $region6: #{tpu_custom_call.1} parent=1 // pred_check
      _
    $region7: #{tpu_custom_call.1} parent=1 // pred_check_branch
      %27 = sbr.rel (0) target = $region9
    $region8: #{tpu_custom_call.1} parent=1 // pred_region
      _
    $region9: #{tpu_custom_call.1} parent=1 // pred_fallthru
      _
    // Predicated region
    $region10: #{tpu_custom_call.1} parent=1 // pred_check
      _
    $region11: #{tpu_custom_call.1} parent=1 // pred_check_branch
      %29 = sbr.rel (0) target = $region13
    $region12: #{tpu_custom_call.1} parent=1 // pred_region
      _
    $region13: #{tpu_custom_call.1} parent=1 // pred_fallthru
      _
    // Predicated region
    $region14: #{tpu_custom_call.1} parent=1 // pred_check
      _
    $region15: #{tpu_custom_call.1} parent=1 // pred_check_branch
      %31 = sbr.rel (0) target = $region17
    $region16: #{tpu_custom_call.1} parent=1 // pred_region
      %32 = dma.done [#allocation4], 256
    $region17: #{tpu_custom_call.1} parent=1 // pred_fallthru
      _
    %v33 = vld [vmem:[#allocation3] sm:$0xff]
    %v34 = vld [vmem:[#allocation3 + $0x8] sm:$0xff]
    %v35 = vld [vmem:[%s1] sm:$0x1]
    %v37 = vlaneseq
    %v38 = vshrl.u32 %v37, 7
    %v39 = vsub.s32 0, %v38
    %v40 = vrot.slane %v35, %v39
    %v42 = vmul.f32 %v33, %v40
    %v43 = vmul.f32 %v34, %v40
    %vm44 = vcmask 261120
    %v45 = vsel %vm44, %v42, 0.0
    %46 = vadd.xlane.f32.xlu0 %v45
    %v47 = vpop.xlane.xlu0 %46
    %v48 = vsel %vm44, %v43, 0.0
    %49 = vadd.xlane.f32.xlu0 %v48
    %v50 = vpop.xlane.xlu0 %49
    %s51 = sld [smem:[#allocation2]]
    %v52 = vstv %s51
    %v53 = vadd.f32 %v47, %v52
    %v54 = vadd.f32 %v50, %v52
    %v57 = vlaneseq
    %v58 = vand.u32 %v57, 127
    %v59 = vlaneseq
    %v60 = vshrl.u32 %v59, 7
    %v61 = vsub.s32 %v58, %v60
    %v62 = vrot.slane %v53, %v61
    %v63 = vlaneseq
    %v64 = vshrl.u32 %v63, 7
    %v65 = vsub.s32 %v58, %v64
    %v66 = vrot.slane %v54, %v65
    %vm67 = vcmask 1041409
    %v68 = vsel %vm67, %v66, %v62
    %vm70 = vcmask 58368
    %v71 = vsel %vm70, %v68, -inf
    %72 = vmax.xlane.f32.xlu0 %v71
    %v73 = vpop.xlane.xlu0 %72
    %v75 = vlaneseq
    %v76 = vshrl.u32 %v75, 7
    %v77 = vsub.s32 0, %v76
    %v78 = vrot.slane %v73, %v77
    %v79 = vlaneseq
    %v80 = vshrl.u32 %v79, 7
    %v81 = vsub.s32 1, %v80
    %v82 = vrot.slane %v73, %v81
    %v85 = vsub.f32 %v53, %v78
    %v86 = vsub.f32 %v54, %v82
    %v87 = vmul.f32 %v85, 1.442695
    %v88 = vpow.pop %v87
    %v89 = vmul.f32 %v86, 1.442695
    %v90 = vpow.pop %v89
    %93 = vset.pattern.permute.xlu0 0
    %94 = vperm.xlu0 %93, %v88
    %v95 = vpop.permute.xlu0 %94
    %96 = vset.pattern.permute.xlu0 0
    %97 = vperm.xlu0 %96, %v90
    %v98 = vpop.permute.xlu0 %97
    %v99 = vlaneseq
    %v100 = vshrl.u32 %v99, 7
    %v101 = vsub.s32 %v58, %v100
    %v102 = vrot.slane %v95, %v101
    %v103 = vlaneseq
    %v104 = vshrl.u32 %v103, 7
    %v105 = vsub.s32 %v58, %v104
    %v106 = vrot.slane %v98, %v105
    %v107 = vsel %vm67, %v106, %v102
    %v109 = vsel %vm70, %v107, 0.0
    %110 = vadd.xlane.f32.xlu0 %v109
    %v111 = vpop.xlane.xlu0 %110
    %v112 = vrcp.pop %v111
    %v113 = vmul.f32 %v111, %v112
    %v114 = vsub.f32 2.0, %v113
    %v115 = vmul.f32 %v112, %v114
    %v117 = vlaneseq
    %v118 = vshrl.u32 %v117, 7
    %v119 = vsub.s32 0, %v118
    %v120 = vrot.slane %v115, %v119
    %v121 = vlaneseq
    %v122 = vshrl.u32 %v121, 7
    %v123 = vsub.s32 1, %v122
    %v124 = vrot.slane %v115, %v123
    %v127 = vmul.f32 %v88, %v120
    %v128 = vmul.f32 %v90, %v124
    %130 = vset.pattern.permute.xlu0 0
    %131 = vperm.xlu0 %130, %v127
    %v132 = vpop.permute.xlu0 %131
    %v133 = vlaneseq
    %v134 = vshrl.u32 %v133, 7
    %v135 = vsub.s32 %v58, %v134
    %v136 = vrot.slane %v132, %v135
    %vm137 = vcmask 64512
    %v138 = vsel %vm137, %v136, 0
    %140 = vmatprep.subr.mxu0 0.0
    %v141 = vand.u32 %v33, 4294901760
    %142 = vmatpush1.msra.mxu0 %v141
    %143 = vmatprep.subr.mxu0 0.0
    %144 = vmatpush1.msra.mxu0 0.0
    %145 = vmatprep.subr.mxu0 0.0
    %146 = vmatpush1.msra.mxu0 0.0
    %147 = vmatprep.subr.mxu0 0.0
    %148 = vmatpush1.msra.mxu0 0.0
    %149 = vmatprep.subr.mxu0 0.0
    %150 = vmatpush1.msra.mxu0 0.0
    %151 = vmatprep.subr.mxu0 0.0
    %152 = vmatpush1.msra.mxu0 0.0
    %153 = vmatprep.subr.mxu0 0.0
    %154 = vmatpush1.msra.mxu0 0.0
    %155 = vmatprep.subr.mxu0 0.0
    %156 = vmatpush1.msra.mxu0 0.0
    %157 = vmatprep.subr.mxu0 0.0
    %158 = vmatpush1.msra.mxu0 0.0
    %159 = vmatprep.subr.mxu0 0.0
    %160 = vmatpush1.msra.mxu0 0.0
    %161 = vmatprep.subr.mxu0 0.0
    %162 = vmatpush1.msra.mxu0 0.0
    %163 = vmatprep.subr.mxu0 0.0
    %164 = vmatpush1.msra.mxu0 0.0
    %165 = vmatprep.subr.mxu0 0.0
    %166 = vmatpush1.msra.mxu0 0.0
    %167 = vmatprep.subr.mxu0 0.0
    %168 = vmatpush1.msra.mxu0 0.0
    %169 = vmatprep.subr.mxu0 0.0
    %170 = vmatpush1.msra.mxu0 0.0
    %171 = vmatprep.subr.mxu0 0.0
    %172 = vmatpush1.msra.mxu0 0.0
    %173 = vmatprep.subr.mxu0 0.0
    %174 = vmatpush1.msra.mxu0 0.0
    %175 = vmatprep.subr.mxu0 0.0
    %176 = vmatpush1.msra.mxu0 0.0
    %177 = vmatprep.subr.mxu0 0.0
    %178 = vmatpush1.msra.mxu0 0.0
    %179 = vmatprep.subr.mxu0 0.0
    %180 = vmatpush1.msra.mxu0 0.0
    %181 = vmatprep.subr.mxu0 0.0
    %182 = vmatpush1.msra.mxu0 0.0
    %183 = vmatprep.subr.mxu0 0.0
    %184 = vmatpush1.msra.mxu0 0.0
    %185 = vmatprep.subr.mxu0 0.0
    %186 = vmatpush1.msra.mxu0 0.0
    %187 = vmatprep.subr.mxu0 0.0
    %188 = vmatpush1.msra.mxu0 0.0
    %189 = vmatprep.subr.mxu0 0.0
    %190 = vmatpush1.msra.mxu0 0.0
    %191 = vmatprep.subr.mxu0 0.0
    %192 = vmatpush1.msra.mxu0 0.0
    %193 = vmatprep.subr.mxu0 0.0
    %194 = vmatpush1.msra.mxu0 0.0
    %195 = vmatprep.subr.mxu0 0.0
    %196 = vmatpush1.msra.mxu0 0.0
    %197 = vmatprep.subr.mxu0 0.0
    %198 = vmatpush1.msra.mxu0 0.0
    %199 = vmatprep.subr.mxu0 0.0
    %200 = vmatpush1.msra.mxu0 0.0
    %201 = vmatprep.subr.mxu0 0.0
    %202 = vmatpush1.msra.mxu0 0.0
    %203 = vmatprep.subr.mxu0 0.0
    %204 = vmatpush1.msra.mxu0 0.0
    %205 = vmatprep.mubr.f32.mxu0 0.0
    %v206 = vand.u32 %v138, 4294901760
    %v207 = vsub.f32 %v138, %v206
    %v208 = vand.u32 %v207, 4294901760
    %v209 = vsub.f32 %v207, %v208
    %v210 = vand.u32 %v209, 4294901760
    %211 = vmatmul.mubr.f32.gmra.mrb[0].mxu0 %v210
    %v212 = vpop.f32.mrb[0].mxu0
    %v213 = vadd.f32 0.0, %v212
    %v214 = vpop.f32.mrb[0].mxu0
    %215 = vdwg.mxu0
    %216 = vmatprep.subr.mxu0 0.0
    %v217 = vand.u32 %v33, 4294901760
    %v218 = vsub.f32 %v33, %v217
    %v219 = vand.u32 %v218, 4294901760
    %v220 = vsub.f32 %v218, %v219
    %v221 = vand.u32 %v220, 4294901760
    %222 = vmatpush1.msra.mxu0 %v221
    %223 = vmatprep.subr.mxu0 0.0
    %224 = vmatpush1.msra.mxu0 0.0
    %225 = vmatprep.subr.mxu0 0.0
    %226 = vmatpush1.msra.mxu0 0.0
    %227 = vmatprep.subr.mxu0 0.0
    %228 = vmatpush1.msra.mxu0 0.0
    %229 = vmatprep.subr.mxu0 0.0
    %230 = vmatpush1.msra.mxu0 0.0
    %231 = vmatprep.subr.mxu0 0.0
    %232 = vmatpush1.msra.mxu0 0.0
    %233 = vmatprep.subr.mxu0 0.0
    %234 = vmatpush1.msra.mxu0 0.0
    %235 = vmatprep.subr.mxu0 0.0
    %236 = vmatpush1.msra.mxu0 0.0
    %237 = vmatprep.subr.mxu0 0.0
    %238 = vmatpush1.msra.mxu0 0.0
    %239 = vmatprep.subr.mxu0 0.0
    %240 = vmatpush1.msra.mxu0 0.0
    %241 = vmatprep.subr.mxu0 0.0
    %242 = vmatpush1.msra.mxu0 0.0
    %243 = vmatprep.subr.mxu0 0.0
    %244 = vmatpush1.msra.mxu0 0.0
    %245 = vmatprep.subr.mxu0 0.0
    %246 = vmatpush1.msra.mxu0 0.0
    %247 = vmatprep.subr.mxu0 0.0
    %248 = vmatpush1.msra.mxu0 0.0
    %249 = vmatprep.subr.mxu0 0.0
    %250 = vmatpush1.msra.mxu0 0.0
    %251 = vmatprep.subr.mxu0 0.0
    %252 = vmatpush1.msra.mxu0 0.0
    %253 = vmatprep.subr.mxu0 0.0
    %254 = vmatpush1.msra.mxu0 0.0
    %255 = vmatprep.subr.mxu0 0.0
    %256 = vmatpush1.msra.mxu0 0.0
    %257 = vmatprep.subr.mxu0 0.0
    %258 = vmatpush1.msra.mxu0 0.0
    %259 = vmatprep.subr.mxu0 0.0
    %260 = vmatpush1.msra.mxu0 0.0
    %261 = vmatprep.subr.mxu0 0.0
    %262 = vmatpush1.msra.mxu0 0.0
    %263 = vmatprep.subr.mxu0 0.0
    %264 = vmatpush1.msra.mxu0 0.0
    %265 = vmatprep.subr.mxu0 0.0
    %266 = vmatpush1.msra.mxu0 0.0
    %267 = vmatprep.subr.mxu0 0.0
    %268 = vmatpush1.msra.mxu0 0.0
    %269 = vmatprep.subr.mxu0 0.0
    %270 = vmatpush1.msra.mxu0 0.0
    %271 = vmatprep.subr.mxu0 0.0
    %272 = vmatpush1.msra.mxu0 0.0
    %273 = vmatprep.subr.mxu0 0.0
    %274 = vmatpush1.msra.mxu0 0.0
    %275 = vmatprep.subr.mxu0 0.0
    %276 = vmatpush1.msra.mxu0 0.0
    %277 = vmatprep.subr.mxu0 0.0
    %278 = vmatpush1.msra.mxu0 0.0
    %279 = vmatprep.subr.mxu0 0.0
    %280 = vmatpush1.msra.mxu0 0.0
    %281 = vmatprep.subr.mxu0 0.0
    %282 = vmatpush1.msra.mxu0 0.0
    %283 = vmatprep.subr.mxu0 0.0
    %284 = vmatpush1.msra.mxu0 0.0
    %285 = vmatprep.mubr.f32.mxu0 0.0
    %v286 = vand.u32 %v138, 4294901760
    %287 = vmatmul.mubr.f32.gmra.mrb[0].mxu0 %v286
    %v288 = vpop.f32.mrb[0].mxu0
    %v289 = vadd.f32 %v213, %v288
    %v290 = vpop.f32.mrb[0].mxu0
    %291 = vdwg.mxu0
    %292 = vmatprep.subr.mxu0 0.0
    %v293 = vand.u32 %v33, 4294901760
    %v294 = vsub.f32 %v33, %v293
    %295 = vmatpush1.msra.mxu0 %v294
    %296 = vmatprep.subr.mxu0 0.0
    %297 = vmatpush1.msra.mxu0 0.0
    %298 = vmatprep.subr.mxu0 0.0
    %299 = vmatpush1.msra.mxu0 0.0
    %300 = vmatprep.subr.mxu0 0.0
    %301 = vmatpush1.msra.mxu0 0.0
    %302 = vmatprep.subr.mxu0 0.0
    %303 = vmatpush1.msra.mxu0 0.0
    %304 = vmatprep.subr.mxu0 0.0
    %305 = vmatpush1.msra.mxu0 0.0
    %306 = vmatprep.subr.mxu0 0.0
    %307 = vmatpush1.msra.mxu0 0.0
    %308 = vmatprep.subr.mxu0 0.0
    %309 = vmatpush1.msra.mxu0 0.0
    %310 = vmatprep.subr.mxu0 0.0
    %311 = vmatpush1.msra.mxu0 0.0
    %312 = vmatprep.subr.mxu0 0.0
    %313 = vmatpush1.msra.mxu0 0.0
    %314 = vmatprep.subr.mxu0 0.0
    %315 = vmatpush1.msra.mxu0 0.0
    %316 = vmatprep.subr.mxu0 0.0
    %317 = vmatpush1.msra.mxu0 0.0
    %318 = vmatprep.subr.mxu0 0.0
    %319 = vmatpush1.msra.mxu0 0.0
    %320 = vmatprep.subr.mxu0 0.0
    %321 = vmatpush1.msra.mxu0 0.0
    %322 = vmatprep.subr.mxu0 0.0
    %323 = vmatpush1.msra.mxu0 0.0
    %324 = vmatprep.subr.mxu0 0.0
    %325 = vmatpush1.msra.mxu0 0.0
    %326 = vmatprep.subr.mxu0 0.0
    %327 = vmatpush1.msra.mxu0 0.0
    %328 = vmatprep.subr.mxu0 0.0
    %329 = vmatpush1.msra.mxu0 0.0
    %330 = vmatprep.subr.mxu0 0.0
    %331 = vmatpush1.msra.mxu0 0.0
    %332 = vmatprep.subr.mxu0 0.0
    %333 = vmatpush1.msra.mxu0 0.0
    %334 = vmatprep.subr.mxu0 0.0
    %335 = vmatpush1.msra.mxu0 0.0
    %336 = vmatprep.subr.mxu0 0.0
    %337 = vmatpush1.msra.mxu0 0.0
    %338 = vmatprep.subr.mxu0 0.0
    %339 = vmatpush1.msra.mxu0 0.0
    %340 = vmatprep.subr.mxu0 0.0
    %341 = vmatpush1.msra.mxu0 0.0
    %342 = vmatprep.subr.mxu0 0.0
    %343 = vmatpush1.msra.mxu0 0.0
    %344 = vmatprep.subr.mxu0 0.0
    %345 = vmatpush1.msra.mxu0 0.0
    %346 = vmatprep.subr.mxu0 0.0
    %347 = vmatpush1.msra.mxu0 0.0
    %348 = vmatprep.subr.mxu0 0.0
    %349 = vmatpush1.msra.mxu0 0.0
    %350 = vmatprep.subr.mxu0 0.0
    %351 = vmatpush1.msra.mxu0 0.0
    %352 = vmatprep.subr.mxu0 0.0
    %353 = vmatpush1.msra.mxu0 0.0
    %354 = vmatprep.subr.mxu0 0.0
    %355 = vmatpush1.msra.mxu0 0.0
    %356 = vmatprep.subr.mxu0 0.0
    %357 = vmatpush1.msra.mxu0 0.0
    %358 = vmatprep.mubr.f32.mxu0 0.0
    %v359 = vand.u32 %v138, 4294901760
    %v360 = vsub.f32 %v138, %v359
    %361 = vmatmul.mubr.f32.gmra.mrb[0].mxu0 %v360
    %v362 = vpop.f32.mrb[0].mxu0
    %v363 = vadd.f32 %v289, %v362
    %v364 = vpop.f32.mrb[0].mxu0
    %365 = vdwg.mxu0
    %366 = vmatprep.subr.mxu0 0.0
    %v367 = vand.u32 %v33, 4294901760
    %368 = vmatpush1.msra.mxu0 %v367
    %369 = vmatprep.subr.mxu0 0.0
    %370 = vmatpush1.msra.mxu0 0.0
    %371 = vmatprep.subr.mxu0 0.0
    %372 = vmatpush1.msra.mxu0 0.0
    %373 = vmatprep.subr.mxu0 0.0
    %374 = vmatpush1.msra.mxu0 0.0
    %375 = vmatprep.subr.mxu0 0.0
    %376 = vmatpush1.msra.mxu0 0.0
    %377 = vmatprep.subr.mxu0 0.0
    %378 = vmatpush1.msra.mxu0 0.0
    %379 = vmatprep.subr.mxu0 0.0
    %380 = vmatpush1.msra.mxu0 0.0
    %381 = vmatprep.subr.mxu0 0.0
    %382 = vmatpush1.msra.mxu0 0.0
    %383 = vmatprep.subr.mxu0 0.0
    %384 = vmatpush1.msra.mxu0 0.0
    %385 = vmatprep.subr.mxu0 0.0
    %386 = vmatpush1.msra.mxu0 0.0
    %387 = vmatprep.subr.mxu0 0.0
    %388 = vmatpush1.msra.mxu0 0.0
    %389 = vmatprep.subr.mxu0 0.0
    %390 = vmatpush1.msra.mxu0 0.0
    %391 = vmatprep.subr.mxu0 0.0
    %392 = vmatpush1.msra.mxu0 0.0
    %393 = vmatprep.subr.mxu0 0.0
    %394 = vmatpush1.msra.mxu0 0.0
    %395 = vmatprep.subr.mxu0 0.0
    %396 = vmatpush1.msra.mxu0 0.0
    %397 = vmatprep.subr.mxu0 0.0
    %398 = vmatpush1.msra.mxu0 0.0
    %399 = vmatprep.subr.mxu0 0.0
    %400 = vmatpush1.msra.mxu0 0.0
    %401 = vmatprep.subr.mxu0 0.0
    %402 = vmatpush1.msra.mxu0 0.0
    %403 = vmatprep.subr.mxu0 0.0
    %404 = vmatpush1.msra.mxu0 0.0
    %405 = vmatprep.subr.mxu0 0.0
    %406 = vmatpush1.msra.mxu0 0.0
    %407 = vmatprep.subr.mxu0 0.0
    %408 = vmatpush1.msra.mxu0 0.0
    %409 = vmatprep.subr.mxu0 0.0
    %410 = vmatpush1.msra.mxu0 0.0
    %411 = vmatprep.subr.mxu0 0.0
    %412 = vmatpush1.msra.mxu0 0.0
    %413 = vmatprep.subr.mxu0 0.0
    %414 = vmatpush1.msra.mxu0 0.0
    %415 = vmatprep.subr.mxu0 0.0
    %416 = vmatpush1.msra.mxu0 0.0
    %417 = vmatprep.subr.mxu0 0.0
    %418 = vmatpush1.msra.mxu0 0.0
    %419 = vmatprep.subr.mxu0 0.0
    %420 = vmatpush1.msra.mxu0 0.0
    %421 = vmatprep.subr.mxu0 0.0
    %422 = vmatpush1.msra.mxu0 0.0
    %423 = vmatprep.subr.mxu0 0.0
    %424 = vmatpush1.msra.mxu0 0.0
    %425 = vmatprep.subr.mxu0 0.0
    %426 = vmatpush1.msra.mxu0 0.0
    %427 = vmatprep.subr.mxu0 0.0
    %428 = vmatpush1.msra.mxu0 0.0
    %429 = vmatprep.subr.mxu0 0.0
    %430 = vmatpush1.msra.mxu0 0.0
    %431 = vmatprep.mubr.f32.mxu0 0.0
    %v432 = vand.u32 %v138, 4294901760
    %v433 = vsub.f32 %v138, %v432
    %v434 = vand.u32 %v433, 4294901760
    %435 = vmatmul.mubr.f32.gmra.mrb[0].mxu0 %v434
    %v436 = vpop.f32.mrb[0].mxu0
    %v437 = vadd.f32 %v363, %v436
    %v438 = vpop.f32.mrb[0].mxu0
    %439 = vdwg.mxu0
    %440 = vmatprep.subr.mxu0 0.0
    %v441 = vand.u32 %v33, 4294901760
    %v442 = vsub.f32 %v33, %v441
    %v443 = vand.u32 %v442, 4294901760
    %444 = vmatpush1.msra.mxu0 %v443
    %445 = vmatprep.subr.mxu0 0.0
    %446 = vmatpush1.msra.mxu0 0.0
    %447 = vmatprep.subr.mxu0 0.0
    %448 = vmatpush1.msra.mxu0 0.0
    %449 = vmatprep.subr.mxu0 0.0
    %450 = vmatpush1.msra.mxu0 0.0
    %451 = vmatprep.subr.mxu0 0.0
    %452 = vmatpush1.msra.mxu0 0.0
    %453 = vmatprep.subr.mxu0 0.0
    %454 = vmatpush1.msra.mxu0 0.0
    %455 = vmatprep.subr.mxu0 0.0
    %456 = vmatpush1.msra.mxu0 0.0
    %457 = vmatprep.subr.mxu0 0.0
    %458 = vmatpush1.msra.mxu0 0.0
    %459 = vmatprep.subr.mxu0 0.0
    %460 = vmatpush1.msra.mxu0 0.0
    %461 = vmatprep.subr.mxu0 0.0
    %462 = vmatpush1.msra.mxu0 0.0
    %463 = vmatprep.subr.mxu0 0.0
    %464 = vmatpush1.msra.mxu0 0.0
    %465 = vmatprep.subr.mxu0 0.0
    %466 = vmatpush1.msra.mxu0 0.0
    %467 = vmatprep.subr.mxu0 0.0
    %468 = vmatpush1.msra.mxu0 0.0
    %469 = vmatprep.subr.mxu0 0.0
    %470 = vmatpush1.msra.mxu0 0.0
    %471 = vmatprep.subr.mxu0 0.0
    %472 = vmatpush1.msra.mxu0 0.0
    %473 = vmatprep.subr.mxu0 0.0
    %474 = vmatpush1.msra.mxu0 0.0
    %475 = vmatprep.subr.mxu0 0.0
    %476 = vmatpush1.msra.mxu0 0.0
    %477 = vmatprep.subr.mxu0 0.0
    %478 = vmatpush1.msra.mxu0 0.0
    %479 = vmatprep.subr.mxu0 0.0
    %480 = vmatpush1.msra.mxu0 0.0
    %481 = vmatprep.subr.mxu0 0.0
    %482 = vmatpush1.msra.mxu0 0.0
    %483 = vmatprep.subr.mxu0 0.0
    %484 = vmatpush1.msra.mxu0 0.0
    %485 = vmatprep.subr.mxu0 0.0
    %486 = vmatpush1.msra.mxu0 0.0
    %487 = vmatprep.subr.mxu0 0.0
    %488 = vmatpush1.msra.mxu0 0.0
    %489 = vmatprep.subr.mxu0 0.0
    %490 = vmatpush1.msra.mxu0 0.0
    %491 = vmatprep.subr.mxu0 0.0
    %492 = vmatpush1.msra.mxu0 0.0
    %493 = vmatprep.subr.mxu0 0.0
    %494 = vmatpush1.msra.mxu0 0.0
    %495 = vmatprep.subr.mxu0 0.0
    %496 = vmatpush1.msra.mxu0 0.0
    %497 = vmatprep.subr.mxu0 0.0
    %498 = vmatpush1.msra.mxu0 0.0
    %499 = vmatprep.subr.mxu0 0.0
    %500 = vmatpush1.msra.mxu0 0.0
    %501 = vmatprep.subr.mxu0 0.0
    %502 = vmatpush1.msra.mxu0 0.0
    %503 = vmatprep.subr.mxu0 0.0
    %504 = vmatpush1.msra.mxu0 0.0
    %505 = vmatprep.subr.mxu0 0.0
    %506 = vmatpush1.msra.mxu0 0.0
    %507 = vmatprep.mubr.f32.mxu0 0.0
    %v508 = vand.u32 %v138, 4294901760
    %509 = vmatmul.mubr.f32.gmra.mrb[0].mxu0 %v508
    %v510 = vpop.f32.mrb[0].mxu0
    %v511 = vadd.f32 %v437, %v510
    %v512 = vpop.f32.mrb[0].mxu0
    %513 = vdwg.mxu0
    %514 = vmatprep.subr.mxu0 0.0
    %v515 = vand.u32 %v33, 4294901760
    %516 = vmatpush1.msra.mxu0 %v515
    %517 = vmatprep.subr.mxu0 0.0
    %518 = vmatpush1.msra.mxu0 0.0
    %519 = vmatprep.subr.mxu0 0.0
    %520 = vmatpush1.msra.mxu0 0.0
    %521 = vmatprep.subr.mxu0 0.0
    %522 = vmatpush1.msra.mxu0 0.0
    %523 = vmatprep.subr.mxu0 0.0
    %524 = vmatpush1.msra.mxu0 0.0
    %525 = vmatprep.subr.mxu0 0.0
    %526 = vmatpush1.msra.mxu0 0.0
    %527 = vmatprep.subr.mxu0 0.0
    %528 = vmatpush1.msra.mxu0 0.0
    %529 = vmatprep.subr.mxu0 0.0
    %530 = vmatpush1.msra.mxu0 0.0
    %531 = vmatprep.subr.mxu0 0.0
    %532 = vmatpush1.msra.mxu0 0.0
    %533 = vmatprep.subr.mxu0 0.0
    %534 = vmatpush1.msra.mxu0 0.0
    %535 = vmatprep.subr.mxu0 0.0
    %536 = vmatpush1.msra.mxu0 0.0
    %537 = vmatprep.subr.mxu0 0.0
    %538 = vmatpush1.msra.mxu0 0.0
    %539 = vmatprep.subr.mxu0 0.0
    %540 = vmatpush1.msra.mxu0 0.0
    %541 = vmatprep.subr.mxu0 0.0
    %542 = vmatpush1.msra.mxu0 0.0
    %543 = vmatprep.subr.mxu0 0.0
    %544 = vmatpush1.msra.mxu0 0.0
    %545 = vmatprep.subr.mxu0 0.0
    %546 = vmatpush1.msra.mxu0 0.0
    %547 = vmatprep.subr.mxu0 0.0
    %548 = vmatpush1.msra.mxu0 0.0
    %549 = vmatprep.subr.mxu0 0.0
    %550 = vmatpush1.msra.mxu0 0.0
    %551 = vmatprep.subr.mxu0 0.0
    %552 = vmatpush1.msra.mxu0 0.0
    %553 = vmatprep.subr.mxu0 0.0
    %554 = vmatpush1.msra.mxu0 0.0
    %555 = vmatprep.subr.mxu0 0.0
    %556 = vmatpush1.msra.mxu0 0.0
    %557 = vmatprep.subr.mxu0 0.0
    %558 = vmatpush1.msra.mxu0 0.0
    %559 = vmatprep.subr.mxu0 0.0
    %560 = vmatpush1.msra.mxu0 0.0
    %561 = vmatprep.subr.mxu0 0.0
    %562 = vmatpush1.msra.mxu0 0.0
    %563 = vmatprep.subr.mxu0 0.0
    %564 = vmatpush1.msra.mxu0 0.0
    %565 = vmatprep.subr.mxu0 0.0
    %566 = vmatpush1.msra.mxu0 0.0
    %567 = vmatprep.subr.mxu0 0.0
    %568 = vmatpush1.msra.mxu0 0.0
    %569 = vmatprep.subr.mxu0 0.0
    %570 = vmatpush1.msra.mxu0 0.0
    %571 = vmatprep.subr.mxu0 0.0
    %572 = vmatpush1.msra.mxu0 0.0
    %573 = vmatprep.subr.mxu0 0.0
    %574 = vmatpush1.msra.mxu0 0.0
    %575 = vmatprep.subr.mxu0 0.0
    %576 = vmatpush1.msra.mxu0 0.0
    %577 = vmatprep.subr.mxu0 0.0
    %578 = vmatpush1.msra.mxu0 0.0
    %579 = vmatprep.mubr.f32.mxu0 0.0
    %v580 = vand.u32 %v138, 4294901760
    %581 = vmatmul.mubr.f32.gmra.mrb[0].mxu0 %v580
    %v582 = vpop.f32.mrb[0].mxu0
    %v583 = vadd.f32 %v511, %v582
    %v584 = vpop.f32.mrb[0].mxu0
    %585 = vdwg.mxu0
    %587 = vset.pattern.permute.xlu0 0
    %588 = vperm.xlu0 %587, %v128
    %v589 = vpop.permute.xlu0 %588
    %v590 = vlaneseq
    %v591 = vshrl.u32 %v590, 7
    %v592 = vsub.s32 %v58, %v591
    %v593 = vrot.slane %v589, %v592
    %v594 = vsel %vm137, %v593, 0
    %596 = vmatprep.subr.mxu0 0.0
    %v597 = vand.u32 %v34, 4294901760
    %598 = vmatpush1.msra.mxu0 %v597
    %599 = vmatprep.subr.mxu0 0.0
    %600 = vmatpush1.msra.mxu0 0.0
    %601 = vmatprep.subr.mxu0 0.0
    %602 = vmatpush1.msra.mxu0 0.0
    %603 = vmatprep.subr.mxu0 0.0
    %604 = vmatpush1.msra.mxu0 0.0
    %605 = vmatprep.subr.mxu0 0.0
    %606 = vmatpush1.msra.mxu0 0.0
    %607 = vmatprep.subr.mxu0 0.0
    %608 = vmatpush1.msra.mxu0 0.0
    %609 = vmatprep.subr.mxu0 0.0
    %610 = vmatpush1.msra.mxu0 0.0
    %611 = vmatprep.subr.mxu0 0.0
    %612 = vmatpush1.msra.mxu0 0.0
    %613 = vmatprep.subr.mxu0 0.0
    %614 = vmatpush1.msra.mxu0 0.0
    %615 = vmatprep.subr.mxu0 0.0
    %616 = vmatpush1.msra.mxu0 0.0
    %617 = vmatprep.subr.mxu0 0.0
    %618 = vmatpush1.msra.mxu0 0.0
    %619 = vmatprep.subr.mxu0 0.0
    %620 = vmatpush1.msra.mxu0 0.0
    %621 = vmatprep.subr.mxu0 0.0
    %622 = vmatpush1.msra.mxu0 0.0
    %623 = vmatprep.subr.mxu0 0.0
    %624 = vmatpush1.msra.mxu0 0.0
    %625 = vmatprep.subr.mxu0 0.0
    %626 = vmatpush1.msra.mxu0 0.0
    %627 = vmatprep.subr.mxu0 0.0
    %628 = vmatpush1.msra.mxu0 0.0
    %629 = vmatprep.subr.mxu0 0.0
    %630 = vmatpush1.msra.mxu0 0.0
    %631 = vmatprep.subr.mxu0 0.0
    %632 = vmatpush1.msra.mxu0 0.0
    %633 = vmatprep.subr.mxu0 0.0
    %634 = vmatpush1.msra.mxu0 0.0
    %635 = vmatprep.subr.mxu0 0.0
    %636 = vmatpush1.msra.mxu0 0.0
    %637 = vmatprep.subr.mxu0 0.0
    %638 = vmatpush1.msra.mxu0 0.0
    %639 = vmatprep.subr.mxu0 0.0
    %640 = vmatpush1.msra.mxu0 0.0
    %641 = vmatprep.subr.mxu0 0.0
    %642 = vmatpush1.msra.mxu0 0.0
    %643 = vmatprep.subr.mxu0 0.0
    %644 = vmatpush1.msra.mxu0 0.0
    %645 = vmatprep.subr.mxu0 0.0
    %646 = vmatpush1.msra.mxu0 0.0
    %647 = vmatprep.subr.mxu0 0.0
    %648 = vmatpush1.msra.mxu0 0.0
    %649 = vmatprep.subr.mxu0 0.0
    %650 = vmatpush1.msra.mxu0 0.0
    %651 = vmatprep.subr.mxu0 0.0
    %652 = vmatpush1.msra.mxu0 0.0
    %653 = vmatprep.subr.mxu0 0.0
    %654 = vmatpush1.msra.mxu0 0.0
    %655 = vmatprep.subr.mxu0 0.0
    %656 = vmatpush1.msra.mxu0 0.0
    %657 = vmatprep.subr.mxu0 0.0
    %658 = vmatpush1.msra.mxu0 0.0
    %659 = vmatprep.subr.mxu0 0.0
    %660 = vmatpush1.msra.mxu0 0.0
    %661 = vmatprep.mubr.f32.mxu0 0.0
    %v662 = vand.u32 %v594, 4294901760
    %v663 = vsub.f32 %v594, %v662
    %v664 = vand.u32 %v663, 4294901760
    %v665 = vsub.f32 %v663, %v664
    %v666 = vand.u32 %v665, 4294901760
    %667 = vmatmul.mubr.f32.gmra.mrb[0].mxu0 %v666
    %v668 = vpop.f32.mrb[0].mxu0
    %v669 = vadd.f32 0.0, %v668
    %v670 = vpop.f32.mrb[0].mxu0
    %671 = vdwg.mxu0
    %672 = vmatprep.subr.mxu0 0.0
    %v673 = vand.u32 %v34, 4294901760
    %v674 = vsub.f32 %v34, %v673
    %v675 = vand.u32 %v674, 4294901760
    %v676 = vsub.f32 %v674, %v675
    %v677 = vand.u32 %v676, 4294901760
    %678 = vmatpush1.msra.mxu0 %v677
    %679 = vmatprep.subr.mxu0 0.0
    %680 = vmatpush1.msra.mxu0 0.0
    %681 = vmatprep.subr.mxu0 0.0
    %682 = vmatpush1.msra.mxu0 0.0
    %683 = vmatprep.subr.mxu0 0.0
    %684 = vmatpush1.msra.mxu0 0.0
    %685 = vmatprep.subr.mxu0 0.0
    %686 = vmatpush1.msra.mxu0 0.0
    %687 = vmatprep.subr.mxu0 0.0
    %688 = vmatpush1.msra.mxu0 0.0
    %689 = vmatprep.subr.mxu0 0.0
    %690 = vmatpush1.msra.mxu0 0.0
    %691 = vmatprep.subr.mxu0 0.0
    %692 = vmatpush1.msra.mxu0 0.0
    %693 = vmatprep.subr.mxu0 0.0
    %694 = vmatpush1.msra.mxu0 0.0
    %695 = vmatprep.subr.mxu0 0.0
    %696 = vmatpush1.msra.mxu0 0.0
    %697 = vmatprep.subr.mxu0 0.0
    %698 = vmatpush1.msra.mxu0 0.0
    %699 = vmatprep.subr.mxu0 0.0
    %700 = vmatpush1.msra.mxu0 0.0
    %701 = vmatprep.subr.mxu0 0.0
    %702 = vmatpush1.msra.mxu0 0.0
    %703 = vmatprep.subr.mxu0 0.0
    %704 = vmatpush1.msra.mxu0 0.0
    %705 = vmatprep.subr.mxu0 0.0
    %706 = vmatpush1.msra.mxu0 0.0
    %707 = vmatprep.subr.mxu0 0.0
    %708 = vmatpush1.msra.mxu0 0.0
    %709 = vmatprep.subr.mxu0 0.0
    %710 = vmatpush1.msra.mxu0 0.0
    %711 = vmatprep.subr.mxu0 0.0
    %712 = vmatpush1.msra.mxu0 0.0
    %713 = vmatprep.subr.mxu0 0.0
    %714 = vmatpush1.msra.mxu0 0.0
    %715 = vmatprep.subr.mxu0 0.0
    %716 = vmatpush1.msra.mxu0 0.0
    %717 = vmatprep.subr.mxu0 0.0
    %718 = vmatpush1.msra.mxu0 0.0
    %719 = vmatprep.subr.mxu0 0.0
    %720 = vmatpush1.msra.mxu0 0.0
    %721 = vmatprep.subr.mxu0 0.0
    %722 = vmatpush1.msra.mxu0 0.0
    %723 = vmatprep.subr.mxu0 0.0
    %724 = vmatpush1.msra.mxu0 0.0
    %725 = vmatprep.subr.mxu0 0.0
    %726 = vmatpush1.msra.mxu0 0.0
    %727 = vmatprep.subr.mxu0 0.0
    %728 = vmatpush1.msra.mxu0 0.0
    %729 = vmatprep.subr.mxu0 0.0
    %730 = vmatpush1.msra.mxu0 0.0
    %731 = vmatprep.subr.mxu0 0.0
    %732 = vmatpush1.msra.mxu0 0.0
    %733 = vmatprep.subr.mxu0 0.0
    %734 = vmatpush1.msra.mxu0 0.0
    %735 = vmatprep.subr.mxu0 0.0
    %736 = vmatpush1.msra.mxu0 0.0
    %737 = vmatprep.subr.mxu0 0.0
    %738 = vmatpush1.msra.mxu0 0.0
    %739 = vmatprep.subr.mxu0 0.0
    %740 = vmatpush1.msra.mxu0 0.0
    %741 = vmatprep.mubr.f32.mxu0 0.0
    %v742 = vand.u32 %v594, 4294901760
    %743 = vmatmul.mubr.f32.gmra.mrb[0].mxu0 %v742
    %v744 = vpop.f32.mrb[0].mxu0
    %v745 = vadd.f32 %v669, %v744
    %v746 = vpop.f32.mrb[0].mxu0
    %747 = vdwg.mxu0
    %748 = vmatprep.subr.mxu0 0.0
    %v749 = vand.u32 %v34, 4294901760
    %v750 = vsub.f32 %v34, %v749
    %751 = vmatpush1.msra.mxu0 %v750
    %752 = vmatprep.subr.mxu0 0.0
    %753 = vmatpush1.msra.mxu0 0.0
    %754 = vmatprep.subr.mxu0 0.0
    %755 = vmatpush1.msra.mxu0 0.0
    %756 = vmatprep.subr.mxu0 0.0
    %757 = vmatpush1.msra.mxu0 0.0
    %758 = vmatprep.subr.mxu0 0.0
    %759 = vmatpush1.msra.mxu0 0.0
    %760 = vmatprep.subr.mxu0 0.0
    %761 = vmatpush1.msra.mxu0 0.0
    %762 = vmatprep.subr.mxu0 0.0
    %763 = vmatpush1.msra.mxu0 0.0
    %764 = vmatprep.subr.mxu0 0.0
    %765 = vmatpush1.msra.mxu0 0.0
    %766 = vmatprep.subr.mxu0 0.0
    %767 = vmatpush1.msra.mxu0 0.0
    %768 = vmatprep.subr.mxu0 0.0
    %769 = vmatpush1.msra.mxu0 0.0
    %770 = vmatprep.subr.mxu0 0.0
    %771 = vmatpush1.msra.mxu0 0.0
    %772 = vmatprep.subr.mxu0 0.0
    %773 = vmatpush1.msra.mxu0 0.0
    %774 = vmatprep.subr.mxu0 0.0
    %775 = vmatpush1.msra.mxu0 0.0
    %776 = vmatprep.subr.mxu0 0.0
    %777 = vmatpush1.msra.mxu0 0.0
    %778 = vmatprep.subr.mxu0 0.0
    %779 = vmatpush1.msra.mxu0 0.0
    %780 = vmatprep.subr.mxu0 0.0
    %781 = vmatpush1.msra.mxu0 0.0
    %782 = vmatprep.subr.mxu0 0.0
    %783 = vmatpush1.msra.mxu0 0.0
    %784 = vmatprep.subr.mxu0 0.0
    %785 = vmatpush1.msra.mxu0 0.0
    %786 = vmatprep.subr.mxu0 0.0
    %787 = vmatpush1.msra.mxu0 0.0
    %788 = vmatprep.subr.mxu0 0.0
    %789 = vmatpush1.msra.mxu0 0.0
    %790 = vmatprep.subr.mxu0 0.0
    %791 = vmatpush1.msra.mxu0 0.0
    %792 = vmatprep.subr.mxu0 0.0
    %793 = vmatpush1.msra.mxu0 0.0
    %794 = vmatprep.subr.mxu0 0.0
    %795 = vmatpush1.msra.mxu0 0.0
    %796 = vmatprep.subr.mxu0 0.0
    %797 = vmatpush1.msra.mxu0 0.0
    %798 = vmatprep.subr.mxu0 0.0
    %799 = vmatpush1.msra.mxu0 0.0
    %800 = vmatprep.subr.mxu0 0.0
    %801 = vmatpush1.msra.mxu0 0.0
    %802 = vmatprep.subr.mxu0 0.0
    %803 = vmatpush1.msra.mxu0 0.0
    %804 = vmatprep.subr.mxu0 0.0
    %805 = vmatpush1.msra.mxu0 0.0
    %806 = vmatprep.subr.mxu0 0.0
    %807 = vmatpush1.msra.mxu0 0.0
    %808 = vmatprep.subr.mxu0 0.0
    %809 = vmatpush1.msra.mxu0 0.0
    %810 = vmatprep.subr.mxu0 0.0
    %811 = vmatpush1.msra.mxu0 0.0
    %812 = vmatprep.subr.mxu0 0.0
    %813 = vmatpush1.msra.mxu0 0.0
    %814 = vmatprep.mubr.f32.mxu0 0.0
    %v815 = vand.u32 %v594, 4294901760
    %v816 = vsub.f32 %v594, %v815
    %817 = vmatmul.mubr.f32.gmra.mrb[0].mxu0 %v816
    %v818 = vpop.f32.mrb[0].mxu0
    %v819 = vadd.f32 %v745, %v818
    %v820 = vpop.f32.mrb[0].mxu0
    %821 = vdwg.mxu0
    %822 = vmatprep.subr.mxu0 0.0
    %v823 = vand.u32 %v34, 4294901760
    %824 = vmatpush1.msra.mxu0 %v823
    %825 = vmatprep.subr.mxu0 0.0
    %826 = vmatpush1.msra.mxu0 0.0
    %827 = vmatprep.subr.mxu0 0.0
    %828 = vmatpush1.msra.mxu0 0.0
    %829 = vmatprep.subr.mxu0 0.0
    %830 = vmatpush1.msra.mxu0 0.0
    %831 = vmatprep.subr.mxu0 0.0
    %832 = vmatpush1.msra.mxu0 0.0
    %833 = vmatprep.subr.mxu0 0.0
    %834 = vmatpush1.msra.mxu0 0.0
    %835 = vmatprep.subr.mxu0 0.0
    %836 = vmatpush1.msra.mxu0 0.0
    %837 = vmatprep.subr.mxu0 0.0
    %838 = vmatpush1.msra.mxu0 0.0
    %839 = vmatprep.subr.mxu0 0.0
    %840 = vmatpush1.msra.mxu0 0.0
    %841 = vmatprep.subr.mxu0 0.0
    %842 = vmatpush1.msra.mxu0 0.0
    %843 = vmatprep.subr.mxu0 0.0
    %844 = vmatpush1.msra.mxu0 0.0
    %845 = vmatprep.subr.mxu0 0.0
    %846 = vmatpush1.msra.mxu0 0.0
    %847 = vmatprep.subr.mxu0 0.0
    %848 = vmatpush1.msra.mxu0 0.0
    %849 = vmatprep.subr.mxu0 0.0
    %850 = vmatpush1.msra.mxu0 0.0
    %851 = vmatprep.subr.mxu0 0.0
    %852 = vmatpush1.msra.mxu0 0.0
    %853 = vmatprep.subr.mxu0 0.0
    %854 = vmatpush1.msra.mxu0 0.0
    %855 = vmatprep.subr.mxu0 0.0
    %856 = vmatpush1.msra.mxu0 0.0
    %857 = vmatprep.subr.mxu0 0.0
    %858 = vmatpush1.msra.mxu0 0.0
    %859 = vmatprep.subr.mxu0 0.0
    %860 = vmatpush1.msra.mxu0 0.0
    %861 = vmatprep.subr.mxu0 0.0
    %862 = vmatpush1.msra.mxu0 0.0
    %863 = vmatprep.subr.mxu0 0.0
    %864 = vmatpush1.msra.mxu0 0.0
    %865 = vmatprep.subr.mxu0 0.0
    %866 = vmatpush1.msra.mxu0 0.0
    %867 = vmatprep.subr.mxu0 0.0
    %868 = vmatpush1.msra.mxu0 0.0
    %869 = vmatprep.subr.mxu0 0.0
    %870 = vmatpush1.msra.mxu0 0.0
    %871 = vmatprep.subr.mxu0 0.0
    %872 = vmatpush1.msra.mxu0 0.0
    %873 = vmatprep.subr.mxu0 0.0
    %874 = vmatpush1.msra.mxu0 0.0
    %875 = vmatprep.subr.mxu0 0.0
    %876 = vmatpush1.msra.mxu0 0.0
    %877 = vmatprep.subr.mxu0 0.0
    %878 = vmatpush1.msra.mxu0 0.0
    %879 = vmatprep.subr.mxu0 0.0
    %880 = vmatpush1.msra.mxu0 0.0
    %881 = vmatprep.subr.mxu0 0.0
    %882 = vmatpush1.msra.mxu0 0.0
    %883 = vmatprep.subr.mxu0 0.0
    %884 = vmatpush1.msra.mxu0 0.0
    %885 = vmatprep.subr.mxu0 0.0
    %886 = vmatpush1.msra.mxu0 0.0
    %887 = vmatprep.mubr.f32.mxu0 0.0
    %v888 = vand.u32 %v594, 4294901760
    %v889 = vsub.f32 %v594, %v888
    %v890 = vand.u32 %v889, 4294901760
    %891 = vmatmul.mubr.f32.gmra.mrb[0].mxu0 %v890
    %v892 = vpop.f32.mrb[0].mxu0
    %v893 = vadd.f32 %v819, %v892
    %v894 = vpop.f32.mrb[0].mxu0
    %895 = vdwg.mxu0
    %896 = vmatprep.subr.mxu0 0.0
    %v897 = vand.u32 %v34, 4294901760
    %v898 = vsub.f32 %v34, %v897
    %v899 = vand.u32 %v898, 4294901760
    %900 = vmatpush1.msra.mxu0 %v899
    %901 = vmatprep.subr.mxu0 0.0
    %902 = vmatpush1.msra.mxu0 0.0
    %903 = vmatprep.subr.mxu0 0.0
    %904 = vmatpush1.msra.mxu0 0.0
    %905 = vmatprep.subr.mxu0 0.0
    %906 = vmatpush1.msra.mxu0 0.0
    %907 = vmatprep.subr.mxu0 0.0
    %908 = vmatpush1.msra.mxu0 0.0
    %909 = vmatprep.subr.mxu0 0.0
    %910 = vmatpush1.msra.mxu0 0.0
    %911 = vmatprep.subr.mxu0 0.0
    %912 = vmatpush1.msra.mxu0 0.0
    %913 = vmatprep.subr.mxu0 0.0
    %914 = vmatpush1.msra.mxu0 0.0
    %915 = vmatprep.subr.mxu0 0.0
    %916 = vmatpush1.msra.mxu0 0.0
    %917 = vmatprep.subr.mxu0 0.0
    %918 = vmatpush1.msra.mxu0 0.0
    %919 = vmatprep.subr.mxu0 0.0
    %920 = vmatpush1.msra.mxu0 0.0
    %921 = vmatprep.subr.mxu0 0.0
    %922 = vmatpush1.msra.mxu0 0.0
    %923 = vmatprep.subr.mxu0 0.0
    %924 = vmatpush1.msra.mxu0 0.0
    %925 = vmatprep.subr.mxu0 0.0
    %926 = vmatpush1.msra.mxu0 0.0
    %927 = vmatprep.subr.mxu0 0.0
    %928 = vmatpush1.msra.mxu0 0.0
    %929 = vmatprep.subr.mxu0 0.0
    %930 = vmatpush1.msra.mxu0 0.0
    %931 = vmatprep.subr.mxu0 0.0
    %932 = vmatpush1.msra.mxu0 0.0
    %933 = vmatprep.subr.mxu0 0.0
    %934 = vmatpush1.msra.mxu0 0.0
    %935 = vmatprep.subr.mxu0 0.0
    %936 = vmatpush1.msra.mxu0 0.0
    %937 = vmatprep.subr.mxu0 0.0
    %938 = vmatpush1.msra.mxu0 0.0
    %939 = vmatprep.subr.mxu0 0.0
    %940 = vmatpush1.msra.mxu0 0.0
    %941 = vmatprep.subr.mxu0 0.0
    %942 = vmatpush1.msra.mxu0 0.0
    %943 = vmatprep.subr.mxu0 0.0
    %944 = vmatpush1.msra.mxu0 0.0
    %945 = vmatprep.subr.mxu0 0.0
    %946 = vmatpush1.msra.mxu0 0.0
    %947 = vmatprep.subr.mxu0 0.0
    %948 = vmatpush1.msra.mxu0 0.0
    %949 = vmatprep.subr.mxu0 0.0
    %950 = vmatpush1.msra.mxu0 0.0
    %951 = vmatprep.subr.mxu0 0.0
    %952 = vmatpush1.msra.mxu0 0.0
    %953 = vmatprep.subr.mxu0 0.0
    %954 = vmatpush1.msra.mxu0 0.0
    %955 = vmatprep.subr.mxu0 0.0
    %956 = vmatpush1.msra.mxu0 0.0
    %957 = vmatprep.subr.mxu0 0.0
    %958 = vmatpush1.msra.mxu0 0.0
    %959 = vmatprep.subr.mxu0 0.0
    %960 = vmatpush1.msra.mxu0 0.0
    %961 = vmatprep.subr.mxu0 0.0
    %962 = vmatpush1.msra.mxu0 0.0
    %963 = vmatprep.mubr.f32.mxu0 0.0
    %v964 = vand.u32 %v594, 4294901760
    %965 = vmatmul.mubr.f32.gmra.mrb[0].mxu0 %v964
    %v966 = vpop.f32.mrb[0].mxu0
    %v967 = vadd.f32 %v893, %v966
    %v968 = vpop.f32.mrb[0].mxu0
    %969 = vdwg.mxu0
    %970 = vmatprep.subr.mxu0 0.0
    %v971 = vand.u32 %v34, 4294901760
    %972 = vmatpush1.msra.mxu0 %v971
    %973 = vmatprep.subr.mxu0 0.0
    %974 = vmatpush1.msra.mxu0 0.0
    %975 = vmatprep.subr.mxu0 0.0
    %976 = vmatpush1.msra.mxu0 0.0
    %977 = vmatprep.subr.mxu0 0.0
    %978 = vmatpush1.msra.mxu0 0.0
    %979 = vmatprep.subr.mxu0 0.0
    %980 = vmatpush1.msra.mxu0 0.0
    %981 = vmatprep.subr.mxu0 0.0
    %982 = vmatpush1.msra.mxu0 0.0
    %983 = vmatprep.subr.mxu0 0.0
    %984 = vmatpush1.msra.mxu0 0.0
    %985 = vmatprep.subr.mxu0 0.0
    %986 = vmatpush1.msra.mxu0 0.0
    %987 = vmatprep.subr.mxu0 0.0
    %988 = vmatpush1.msra.mxu0 0.0
    %989 = vmatprep.subr.mxu0 0.0
    %990 = vmatpush1.msra.mxu0 0.0
    %991 = vmatprep.subr.mxu0 0.0
    %992 = vmatpush1.msra.mxu0 0.0
    %993 = vmatprep.subr.mxu0 0.0
    %994 = vmatpush1.msra.mxu0 0.0
    %995 = vmatprep.subr.mxu0 0.0
    %996 = vmatpush1.msra.mxu0 0.0
    %997 = vmatprep.subr.mxu0 0.0
    %998 = vmatpush1.msra.mxu0 0.0
    %999 = vmatprep.subr.mxu0 0.0
    %1000 = vmatpush1.msra.mxu0 0.0
    %1001 = vmatprep.subr.mxu0 0.0
    %1002 = vmatpush1.msra.mxu0 0.0
    %1003 = vmatprep.subr.mxu0 0.0
    %1004 = vmatpush1.msra.mxu0 0.0
    %1005 = vmatprep.subr.mxu0 0.0
    %1006 = vmatpush1.msra.mxu0 0.0
    %1007 = vmatprep.subr.mxu0 0.0
    %1008 = vmatpush1.msra.mxu0 0.0
    %1009 = vmatprep.subr.mxu0 0.0
    %1010 = vmatpush1.msra.mxu0 0.0
    %1011 = vmatprep.subr.mxu0 0.0
    %1012 = vmatpush1.msra.mxu0 0.0
    %1013 = vmatprep.subr.mxu0 0.0
    %1014 = vmatpush1.msra.mxu0 0.0
    %1015 = vmatprep.subr.mxu0 0.0
    %1016 = vmatpush1.msra.mxu0 0.0
    %1017 = vmatprep.subr.mxu0 0.0
    %1018 = vmatpush1.msra.mxu0 0.0
    %1019 = vmatprep.subr.mxu0 0.0
    %1020 = vmatpush1.msra.mxu0 0.0
    %1021 = vmatprep.subr.mxu0 0.0
    %1022 = vmatpush1.msra.mxu0 0.0
    %1023 = vmatprep.subr.mxu0 0.0
    %1024 = vmatpush1.msra.mxu0 0.0
    %1025 = vmatprep.subr.mxu0 0.0
    %1026 = vmatpush1.msra.mxu0 0.0
    %1027 = vmatprep.subr.mxu0 0.0
    %1028 = vmatpush1.msra.mxu0 0.0
    %1029 = vmatprep.subr.mxu0 0.0
    %1030 = vmatpush1.msra.mxu0 0.0
    %1031 = vmatprep.subr.mxu0 0.0
    %1032 = vmatpush1.msra.mxu0 0.0
    %1033 = vmatprep.subr.mxu0 0.0
    %1034 = vmatpush1.msra.mxu0 0.0
    %1035 = vmatprep.mubr.f32.mxu0 0.0
    %v1036 = vand.u32 %v594, 4294901760
    %1037 = vmatmul.mubr.f32.gmra.mrb[0].mxu0 %v1036
    %v1038 = vpop.f32.mrb[0].mxu0
    %v1039 = vadd.f32 %v967, %v1038
    %v1040 = vpop.f32.mrb[0].mxu0
    %1041 = vdwg.mxu0
    %v1044 = vrot.slane %v1039, 7
    %v1045 = vsel %vm67, %v1044, %v583
    %vm1047 = vcmask 254976
    %1048 = vst.msk [vmem:[#allocation6] sm:$0x3] %vm1047, %v1045
    %v1049 = vsel %vm67, %v593, %v136
    %1051 = vst.msk [vmem:[#allocation7] sm:$0x3] %vm70, %v1049
    // Predicated region
    $region18: #{tpu_custom_call.1} parent=1 // pred_check
      _
    $region19: #{tpu_custom_call.1} parent=1 // pred_check_branch
      %1053 = sbr.rel (0) target = $region21
    $region20: #{tpu_custom_call.1} parent=1 // pred_region
      %s1055 = ssub.s32 32, 32
      %1056 = vsyncadd [#allocation5], %s1055
      %s1058 = sshll.u32 [#allocation6], 4
      %s1059 = int_to_ptr.vmem [resolvable:$true] %s1058
      %1061 = dma.vmem_to_hbm [thread:$0]  %s1059, 32, %s3, [#allocation5]
    $region21: #{tpu_custom_call.1} parent=1 // pred_fallthru
      _
    // Predicated region
    $region22: #{tpu_custom_call.1} parent=1 // pred_check
      _
    $region23: #{tpu_custom_call.1} parent=1 // pred_check_branch
      %1063 = sbr.rel (0) target = $region25
    $region24: #{tpu_custom_call.1} parent=1 // pred_region
      %s1065 = ssub.s32 32, 32
      %1066 = vsyncadd [#allocation8], %s1065
      %s1068 = sshll.u32 [#allocation7], 4
      %s1069 = int_to_ptr.vmem [resolvable:$true] %s1068
      %1071 = dma.vmem_to_hbm [thread:$0]  %s1069, 32, %s4, [#allocation8]
    $region25: #{tpu_custom_call.1} parent=1 // pred_fallthru
      _
    // Predicated region
    $region26: #{tpu_custom_call.1} parent=1 // pred_check
      _
    $region27: #{tpu_custom_call.1} parent=1 // pred_check_branch
      %1073 = sbr.rel (0) target = $region29
    $region28: #{tpu_custom_call.1} parent=1 // pred_region
      %1074 = dma.done [#allocation5], 32
    $region29: #{tpu_custom_call.1} parent=1 // pred_fallthru
      _
    // Predicated region
    $region30: #{tpu_custom_call.1} parent=1 // pred_check
      _
    $region31: #{tpu_custom_call.1} parent=1 // pred_check_branch
      %1076 = sbr.rel (0) target = $region33
    $region32: #{tpu_custom_call.1} parent=1 // pred_region
      %1077 = dma.done [#allocation8], 32
    $region33: #{tpu_custom_call.1} parent=1 // pred_fallthru
      _
    %1078 = vsyncpa [#allocation4], 1
    %1079 = vsyncpa [#allocation5], 1
    %1080 = vsyncpa [#allocation8], 1

</llo_original>
